<compile_context>
chip_gen: v6e
topology: v6e:2x2x1
jax: 0.10.0
libtpu: 0.0.40
codegen_flags: <defaults>
</compile_context>

<pallas_src>
import math
import jax
import jax.numpy as jnp
from jax.experimental import pallas as pl
from jax.experimental.pallas import tpu as pltpu

_MiB = 1024 * 1024


def _round_up(a: int, b: int) -> int:
    return ((a + b - 1) // b) * b


# ---------------------------------------------------------------------------
# Kernel bodies
# ---------------------------------------------------------------------------
def _chunk_contrib(x_ref, w12_ref, b12_ref, wo_ref, tn):
    """f32 contribution of one hidden chunk to the output projection."""
    xb = x_ref[...].astype(jnp.bfloat16)                     # resident x tile
    # Fused W1||W2 projection: a single MXU pass over x per k-step.
    h = jnp.dot(xb, w12_ref[...], preferred_element_type=jnp.float32)
    h = h + b12_ref[...]                                     # f32 bias add
    h1 = h[:, :tn]                                           # lane-aligned split
    h2 = h[:, tn:]
    gated = (h1 * jax.nn.sigmoid(h1)) * h2                   # SwiGLU gate, f32
    return jnp.dot(gated.astype(jnp.bfloat16), wo_ref[...],
                   preferred_element_type=jnp.float32)


def _make_kernel(tn: int, acc_in_output: bool):
    if acc_in_output:
        # Output dtype is f32: the output block (resident across the k axis) is
        # the accumulator itself -> no extra VMEM scratch.
        def kernel(x_ref, w12_ref, b12_ref, wo_ref, bo_ref, o_ref):
            k = pl.program_id(1)

            @pl.when(k == 0)
            def _():
                o_ref[...] = jnp.broadcast_to(bo_ref[...], o_ref.shape)

            o_ref[...] += _chunk_contrib(x_ref, w12_ref, b12_ref, wo_ref, tn)
        return kernel

    def kernel(x_ref, w12_ref, b12_ref, wo_ref, bo_ref, o_ref, acc_ref):
        k = pl.program_id(1)

        @pl.when(k == 0)
        def _():
            acc_ref[...] = jnp.broadcast_to(bo_ref[...], acc_ref.shape)

        acc_ref[...] += _chunk_contrib(x_ref, w12_ref, b12_ref, wo_ref, tn)

        @pl.when(k == pl.num_programs(1) - 1)
        def _():
            o_ref[...] = acc_ref[...].astype(o_ref.dtype)
    return kernel


# ---------------------------------------------------------------------------
# Generation-aware configuration
# ---------------------------------------------------------------------------
def _tpu_config():
    """Returns (physical VMEM bytes, lowercase device kind)."""
    kind = ""
    try:
        kind = jax.devices()[0].device_kind.lower()
    except Exception:
        pass
    physical = None
    try:
        cap = getattr(pltpu.get_tpu_info(), "vmem_capacity_bytes", None)
        if cap:
            physical = int(cap)
    except Exception:
        physical = None
    if physical is None or physical <= 0:
        if "v7" in kind:
            physical = 64 * _MiB
        elif "v2" in kind or "v3" in kind:
            physical = 16 * _MiB
        elif any(v in kind for v in ("v4", "v5", "v6")):
            physical = 128 * _MiB
        else:
            physical = 64 * _MiB          # conservative default
    return physical, kind


def _estimate_vmem(tm: int, tn: int, dim: int, x_bytes: int) -> int:
    """VMEM footprint estimate (bytes), incl. elementwise temporaries."""
    streamed = 2 * (dim * 2 * tn * 2      # W1||W2 chunk (bf16, double-buffered)
                    + tn * dim * 2        # Wo chunk (bf16)
                    + 2 * tn * 4)         # b1||b2 chunk (f32)
    resident = (2 * tm * dim * x_bytes    # x tile (double-buffered, input dtype)
                + 8 * tm * dim            # f32 out dbl-buf OR out dbl-buf + f32 scratch
                + 2 * dim * 4)            # bout
    temps = 24 * tm * tn + 4 * tm * dim   # h, h1/h2, sigmoid, gated, bf16 casts
    return streamed + resident + temps


def _pick_tiles(M, dim, hidden, budget, kind, x_bytes):
    is_v5 = "v5" in kind
    is_v7 = "v7" in kind

    # v5e is already compute-bound at tm=256; v6e/v7x want tm as large as fits.
    tm_cap = 256 if is_v5 else 1024
    tm = min(tm_cap, max(16, _round_up(M, 16)))
    # v7x: keep both TensorCores busy (>= 2 M-blocks) at small/medium M.
    if is_v7 and M >= 32:
        tm = min(tm, max(16, _round_up((M + 1) // 2, 16)))

    cands = sorted({c for c in (2048, 1024, 512, 256, 128) if hidden % c == 0}
                   | {hidden})
    big = [c for c in cands if c >= 512] or cands    # tn floor of 512 if possible
    tn_min = min(big)

    # 1) Maximize tm subject to tn >= the floor.
    while tm > 16 and _estimate_vmem(tm, tn_min, dim, x_bytes) > budget:
        tm = max(16, _round_up(tm // 2, 16))
    if _estimate_vmem(tm, tn_min, dim, x_bytes) > budget:
        # Still over budget at tm=16: allow tn below the floor.
        for c in sorted(cands):
            if _estimate_vmem(tm, c, dim, x_bytes) <= budget:
                return tm, c
        return tm, min(cands)             # best effort
    # 2) Spend leftover budget on a larger tn (fewer, bigger DMA steps).
    tn = tn_min
    for c in sorted(big, reverse=True):
        if _estimate_vmem(tm, c, dim, x_bytes) <= budget:
            tn = c
            break
    return tm, tn


# ---------------------------------------------------------------------------
# Wrapper
# ---------------------------------------------------------------------------
def feed_forward_pallas(x, w1_t, b1, w2_t, b2, wo_t, bo, *, tm=None, tn=None):
    """x: (B, S, dim). Weights pre-transposed: (in_features, out_features)."""
    B, S, dim = x.shape
    hidden = w1_t.shape[1]
    M = B * S
    x_bytes = jnp.dtype(x.dtype).itemsize

    physical_vmem, kind = _tpu_config()
    budget = max(12 * _MiB, int(physical_vmem * 0.78))

    auto_tm, auto_tn = _pick_tiles(M, dim, hidden, budget, kind, x_bytes)
    tm = tm if tm is not None else auto_tm
    tn = tn if tn is not None else auto_tn
    assert hidden % tn == 0, "hidden must be divisible by the hidden tile size"

    K = hidden // tn
    Mp = _round_up(M, tm)
    n_i = Mp // tm

    # x stays in its original dtype; the kernel casts the resident tile to bf16.
    x2d = x.reshape(M, dim)
    if Mp != M:
        x2d = jnp.pad(x2d, ((0, Mp - M), (0, 0)))

    # Pre-chunk weights into contiguous per-k slabs; fuse W1||W2 and b1||b2.
    w1c = w1_t.reshape(dim, K, tn).transpose(1, 0, 2)                 # (K, dim, tn)
    w2c = w2_t.reshape(dim, K, tn).transpose(1, 0, 2)
    w12 = jnp.concatenate([w1c, w2c], axis=2).astype(jnp.bfloat16)    # (K, dim, 2tn)
    b12 = jnp.concatenate([b1.reshape(K, 1, tn), b2.reshape(K, 1, tn)],
                          axis=2).astype(jnp.float32)                 # (K, 1, 2tn)
    woc = wo_t.reshape(K, tn, dim).astype(jnp.bfloat16)               # (K, tn, dim)
    bo2 = bo.reshape(1, dim).astype(jnp.float32)

    acc_in_output = (x.dtype == jnp.float32)
    out_dtype = jnp.float32 if acc_in_output else x.dtype
    scratch_shapes = [] if acc_in_output else [pltpu.VMEM((tm, dim), jnp.float32)]

    vmem_est = _estimate_vmem(tm, tn, dim, x_bytes)
    vmem_limit = int(min(physical_vmem - 2 * _MiB,
                         max(vmem_est + 8 * _MiB, 32 * _MiB)))

    flops = 6 * Mp * dim * hidden
    weight_bytes = w12.size * 2 + woc.size * 2 + b12.size * 4 + bo2.size * 4
    bytes_accessed = int(Mp * dim * x_bytes                 # x read once
                         + weight_bytes * n_i               # weights re-streamed per M-block
                         + Mp * dim * jnp.dtype(out_dtype).itemsize)

    out2d = pl.pallas_call(
        _make_kernel(tn, acc_in_output),
        out_shape=jax.ShapeDtypeStruct((Mp, dim), out_dtype),
        grid_spec=pltpu.PrefetchScalarGridSpec(
            num_scalar_prefetch=0,
            grid=(n_i, K),
            in_specs=[
                pl.BlockSpec((tm, dim), lambda i, k: (i, 0)),               # x tile
                pl.BlockSpec((None, dim, 2 * tn), lambda i, k: (k, 0, 0)),  # W1||W2
                pl.BlockSpec((None, 1, 2 * tn), lambda i, k: (k, 0, 0)),    # b1||b2
                pl.BlockSpec((None, tn, dim), lambda i, k: (k, 0, 0)),      # Wout
                pl.BlockSpec((1, dim), lambda i, k: (0, 0)),                # bout
            ],
            out_specs=pl.BlockSpec((tm, dim), lambda i, k: (i, 0)),
            scratch_shapes=scratch_shapes,
        ),
        compiler_params=pltpu.CompilerParams(
            dimension_semantics=("parallel", "arbitrary"),
            vmem_limit_bytes=vmem_limit),
        cost_estimate=pl.CostEstimate(
            flops=flops,
            transcendentals=Mp * hidden,
            bytes_accessed=bytes_accessed),
    )(x2d, w12, b12, woc, bo2)

    out2d = out2d[:M]
    if out2d.dtype != x.dtype:
        out2d = out2d.astype(x.dtype)
    return out2d.reshape(B, S, dim)


# ---------------------------------------------------------------------------
# Params / reference
# ---------------------------------------------------------------------------
def init_params(key, dim, hidden_dim_arg, multiple_of=256, dtype=jnp.float32):
    """Deterministic torch-Linear-style init (uniform in +-1/sqrt(fan_in))."""
    hidden = int(2 * hidden_dim_arg / 3)
    hidden = multiple_of * ((hidden + multiple_of - 1) // multiple_of)

    ks = jax.random.split(key, 6)
    bnd_in = 1.0 / math.sqrt(dim)
    bnd_out = 1.0 / math.sqrt(hidden)
    # Stored pre-transposed: (in_features, out_features)
    w1_t = jax.random.uniform(ks[0], (dim, hidden), dtype, -bnd_in, bnd_in)
    b1 = jax.random.uniform(ks[1], (hidden,), dtype, -bnd_in, bnd_in)
    w2_t = jax.random.uniform(ks[2], (dim, hidden), dtype, -bnd_in, bnd_in)
    b2 = jax.random.uniform(ks[3], (hidden,), dtype, -bnd_in, bnd_in)
    wo_t = jax.random.uniform(ks[4], (hidden, dim), dtype, -bnd_out, bnd_out)
    bo = jax.random.uniform(ks[5], (dim,), dtype, -bnd_out, bnd_out)
    return w1_t, b1, w2_t, b2, wo_t, bo, hidden


def feed_forward_ref(x, w1_t, b1, w2_t, b2, wo_t, bo):
    """Reference mirroring the kernel's precision policy (bf16 matmul, f32 acc)."""
    xb = x.astype(jnp.bfloat16)
    h1 = jnp.dot(xb, w1_t.astype(jnp.bfloat16),
                 preferred_element_type=jnp.float32) + b1
    h2 = jnp.dot(xb, w2_t.astype(jnp.bfloat16),
                 preferred_element_type=jnp.float32) + b2
    g = jax.nn.silu(h1) * h2
    y = jnp.dot(g.astype(jnp.bfloat16), wo_t.astype(jnp.bfloat16),
                preferred_element_type=jnp.float32) + bo
    return y.astype(x.dtype)


if __name__ == "__main__":
    key = jax.random.PRNGKey(0)
    k_x, k_p = jax.random.split(key)

    # Small shapes consistent with the module: batch=2, seq=8, dim=64,
    # hidden_dim arg=128 -> rounded hidden = 256 (multiple_of=256).
    B, S, dim, hidden_arg = 2, 8, 64, 128
    w1_t, b1, w2_t, b2, wo_t, bo, hidden = init_params(k_p, dim, hidden_arg)

    x = jax.random.normal(k_x, (B, S, dim), jnp.float32)

    y = feed_forward_pallas(x, w1_t, b1, w2_t, b2, wo_t, bo)
    y = jax.block_until_ready(y)

    y_ref = feed_forward_ref(x, w1_t, b1, w2_t, b2, wo_t, bo)
    assert y.shape == (B, S, dim)
    assert jnp.allclose(y, y_ref, atol=1e-2, rtol=1e-2), (
        float(jnp.max(jnp.abs(y - y_ref))))

    print("KERNEL_OK")
</pallas_src>

<mosaic_0001>
module attributes {stable_mosaic.version = 11 : i64} {
  func.func @kernel(%arg0: i32, %arg1: i32, %arg2: memref<16x64xf32, #tpu.memory_space<vmem>>, %arg3: memref<1x64x512xbf16, #tpu.memory_space<vmem>>, %arg4: memref<1x1x512xf32, #tpu.memory_space<vmem>>, %arg5: memref<1x256x64xbf16, #tpu.memory_space<vmem>>, %arg6: memref<1x64xf32, #tpu.memory_space<vmem>>, %arg7: memref<16x64xf32, #tpu.memory_space<vmem>>) attributes {dimension_semantics = [#tpu.dimension_semantics<parallel>, #tpu.dimension_semantics<arbitrary>], iteration_bounds = array<i64: 1, 1>, scalar_prefetch = 0 : i64, scratch_operands = 0 : i64, tpu.core_type = #tpu.core_type<tc>, window_params = [{transform_indices = @transform_0, window_bounds = array<i64: 16, 64>}, {transform_indices = @transform_1, window_bounds = array<i64: 1, 64, 512>}, {transform_indices = @transform_2, window_bounds = array<i64: 1, 1, 512>}, {transform_indices = @transform_3, window_bounds = array<i64: 1, 256, 64>}, {pipeline_mode = #tpu.pipeline_mode<synchronous>, transform_indices = @transform_4, window_bounds = array<i64: 1, 64>}, {transform_indices = @transform_5, window_bounds = array<i64: 16, 64>}]} {
    %c0_i32 = arith.constant 0 : i32
    %0 = arith.cmpi eq, %arg1, %c0_i32 : i32
    %1 = arith.extui %0 : i1 to i32
    %c0_i32_0 = arith.constant 0 : i32
    %2 = arith.cmpi ne, %1, %c0_i32_0 : i32
    scf.if %2 {
      %c0_17 = arith.constant 0 : index
      %c0_18 = arith.constant 0 : index
      %28 = vector.load %arg6[%c0_17, %c0_18] : memref<1x64xf32, #tpu.memory_space<vmem>>, vector<1x64xf32>
      %29 = vector.shape_cast %28 : vector<1x64xf32> to vector<1x64xf32>
      %30 = vector.broadcast %29 : vector<1x64xf32> to vector<16x64xf32>
      %c0_19 = arith.constant 0 : index
      %c0_20 = arith.constant 0 : index
      %31 = vector.load %arg7[%c0_19, %c0_20] : memref<16x64xf32, #tpu.memory_space<vmem>>, vector<16x64xf32>
      tpu.vector_store %arg7[%c0_19, %c0_20], %30 {strides = array<i32>} : memref<16x64xf32, #tpu.memory_space<vmem>>, vector<16x64xf32>,
    } else {
    }
    %c0 = arith.constant 0 : index
    %c0_1 = arith.constant 0 : index
    %3 = vector.load %arg7[%c0, %c0_1] : memref<16x64xf32, #tpu.memory_space<vmem>>, vector<16x64xf32>
    %c0_2 = arith.constant 0 : index
    %c0_3 = arith.constant 0 : index
    %4 = vector.load %arg2[%c0_2, %c0_3] : memref<16x64xf32, #tpu.memory_space<vmem>>, vector<16x64xf32>
    %5 = arith.truncf %4 : vector<16x64xf32> to vector<16x64xbf16>
    %c0_4 = arith.constant 0 : index
    %c0_5 = arith.constant 0 : index
    %c0_6 = arith.constant 0 : index
    %6 = vector.load %arg3[%c0_4, %c0_5, %c0_6] : memref<1x64x512xbf16, #tpu.memory_space<vmem>>, vector<1x64x512xbf16>
    %7 = vector.shape_cast %6 : vector<1x64x512xbf16> to vector<64x512xbf16>
    %cst = arith.constant dense<0.000000e+00> : vector<16x512xf32>
    %8 = tpu.matmul %5, %7, %cst {dimension_numbers = #tpu.dot_dimension_numbers<[1], [0], [0], [1], [0, 0, 1, 1], [], []>} : vector<16x64xbf16>, vector<64x512xbf16>, vector<16x512xf32> -> vector<16x512xf32>
    %c0_7 = arith.constant 0 : index
    %c0_8 = arith.constant 0 : index
    %c0_9 = arith.constant 0 : index
    %9 = vector.load %arg4[%c0_7, %c0_8, %c0_9] : memref<1x1x512xf32, #tpu.memory_space<vmem>>, vector<1x1x512xf32>
    %10 = vector.shape_cast %9 : vector<1x1x512xf32> to vector<1x512xf32>
    %11 = vector.broadcast %10 : vector<1x512xf32> to vector<16x512xf32>
    %12 = arith.addf %8, %11 : vector<16x512xf32>
    %13 = vector.extract_strided_slice %12 {offsets = [0, 0], sizes = [16, 256], strides = [1, 1]} : vector<16x512xf32> to vector<16x256xf32>
    %14 = vector.extract_strided_slice %12 {offsets = [0, 256], sizes = [16, 256], strides = [1, 1]} : vector<16x512xf32> to vector<16x256xf32>
    %15 = arith.negf %13 : vector<16x256xf32>
    %16 = math.exp %15 : vector<16x256xf32>
    %cst_10 = arith.constant 1.000000e+00 : f32
    %17 = vector.broadcast %cst_10 : f32 to vector<16x256xf32>
    %18 = arith.addf %17, %16 : vector<16x256xf32>
    %19 = arith.divf %17, %18 : vector<16x256xf32>
    %20 = arith.mulf %13, %19 : vector<16x256xf32>
    %21 = arith.mulf %20, %14 : vector<16x256xf32>
    %22 = arith.truncf %21 : vector<16x256xf32> to vector<16x256xbf16>
    %c0_11 = arith.constant 0 : index
    %c0_12 = arith.constant 0 : index
    %c0_13 = arith.constant 0 : index
    %23 = vector.load %arg5[%c0_11, %c0_12, %c0_13] : memref<1x256x64xbf16, #tpu.memory_space<vmem>>, vector<1x256x64xbf16>
    %24 = vector.shape_cast %23 : vector<1x256x64xbf16> to vector<256x64xbf16>
    %cst_14 = arith.constant dense<0.000000e+00> : vector<16x64xf32>
    %25 = tpu.matmul %22, %24, %cst_14 {dimension_numbers = #tpu.dot_dimension_numbers<[1], [0], [0], [1], [0, 0, 1, 1], [], []>} : vector<16x256xbf16>, vector<256x64xbf16>, vector<16x64xf32> -> vector<16x64xf32>
    %26 = arith.addf %3, %25 : vector<16x64xf32>
    %c0_15 = arith.constant 0 : index
    %c0_16 = arith.constant 0 : index
    %27 = vector.load %arg7[%c0_15, %c0_16] : memref<16x64xf32, #tpu.memory_space<vmem>>, vector<16x64xf32>
    tpu.vector_store %arg7[%c0_15, %c0_16], %26 {strides = array<i32>} : memref<16x64xf32, #tpu.memory_space<vmem>>, vector<16x64xf32>,
    return
  }
  func.func @transform_0(%arg0: i32, %arg1: i32) -> (i32, i32) {
    %c0_i32 = arith.constant 0 : i32
    %c0_i32_0 = arith.constant 0 : i32
    return %arg0, %c0_i32 : i32, i32
  }
  func.func @transform_1(%arg0: i32, %arg1: i32) -> (i32, i32, i32) {
    %c0_i32 = arith.constant 0 : i32
    %c0_i32_0 = arith.constant 0 : i32
    %c0_i32_1 = arith.constant 0 : i32
    return %arg1, %c0_i32, %c0_i32_0 : i32, i32, i32
  }
  func.func @transform_2(%arg0: i32, %arg1: i32) -> (i32, i32, i32) {
    %c0_i32 = arith.constant 0 : i32
    %c0_i32_0 = arith.constant 0 : i32
    %c0_i32_1 = arith.constant 0 : i32
    return %arg1, %c0_i32, %c0_i32_0 : i32, i32, i32
  }
  func.func @transform_3(%arg0: i32, %arg1: i32) -> (i32, i32, i32) {
    %c0_i32 = arith.constant 0 : i32
    %c0_i32_0 = arith.constant 0 : i32
    %c0_i32_1 = arith.constant 0 : i32
    return %arg1, %c0_i32, %c0_i32_0 : i32, i32, i32
  }
  func.func @transform_4(%arg0: i32, %arg1: i32) -> (i32, i32) {
    %c0_i32 = arith.constant 0 : i32
    %c0_i32_0 = arith.constant 0 : i32
    %c0_i32_1 = arith.constant 0 : i32
    return %c0_i32, %c0_i32_0 : i32, i32
  }
  func.func @transform_5(%arg0: i32, %arg1: i32) -> (i32, i32) {
    %c0_i32 = arith.constant 0 : i32
    %c0_i32_0 = arith.constant 0 : i32
    return %arg0, %c0_i32 : i32, i32
  }
}

</mosaic_0001>

<llo_original>
// kernel: tpu_custom_call.1
$region0: #{tpu_custom_call.1}
  #allocation0 [shape = 'u32[]', space=smem, size = 0x4, offset = 0x4, fixed_abs, tag = 'smem constant byte address 0x4 - core index']
  #allocation1 [shape = 'u32[144,128]{1,0:T(1,128)}', space=vmem, size = 0x12000, scoped, tag = 'internal scratch']
  %s0 = inlined_call_operand.vmem [shape: f32[16,64], index: 0, kind: input, shape index: {}]
  %s1 = inlined_call_operand.vmem [shape: bf16[1,64,512], index: 1, kind: input, shape index: {}]
  %s2 = inlined_call_operand.vmem [shape: f32[1,1,512], index: 2, kind: input, shape index: {}]
  %s3 = inlined_call_operand.vmem [shape: bf16[1,256,64], index: 3, kind: input, shape index: {}]
  %s4 = inlined_call_operand.vmem [shape: f32[1,64], index: 4, kind: input, shape index: {}]
  %s5 = inlined_call_operand.hbm [shape: f32[16,64], index: 5, kind: output, shape index: {}]
  %s6 = sld [smem:[#allocation0]]
  $region34: #{tpu_custom_call.1} parent=0
    _
  %s8 = ssub.s32 1, %s6
  %s9 = scalar_select 0, %s8, %s6
  $region1: #{tpu_custom_call.1} parent=0
    #allocation2 [shape = 'u8[8192]{0}', space=vmem, size = 0x2000, scoped, tag = 'output window, operand 0, single buffered']
    #allocation3 [shape = 's32[1]{0}', space=sflag, size = 0x4, scoped, tag = 'scoped memory for tpu_custom_call.1']
    %10 = vsyncpa [#allocation3], 0
    // Predicated region
    $region2: #{tpu_custom_call.1} parent=1 // pred_check
      _
    $region3: #{tpu_custom_call.1} parent=1 // pred_check_branch
      %12 = sbr.rel (0) target = $region5
    $region4: #{tpu_custom_call.1} parent=1 // pred_region
      _
    $region5: #{tpu_custom_call.1} parent=1 // pred_fallthru
      _
    // Predicated region
    $region6: #{tpu_custom_call.1} parent=1 // pred_check
      _
    $region7: #{tpu_custom_call.1} parent=1 // pred_check_branch
      %14 = sbr.rel (0) target = $region9
    $region8: #{tpu_custom_call.1} parent=1 // pred_region
      _
    $region9: #{tpu_custom_call.1} parent=1 // pred_fallthru
      _
    // Predicated region
    $region10: #{tpu_custom_call.1} parent=1 // pred_check
      _
    $region11: #{tpu_custom_call.1} parent=1 // pred_check_branch
      %16 = sbr.rel (0) target = $region13
    $region12: #{tpu_custom_call.1} parent=1 // pred_region
      _
    $region13: #{tpu_custom_call.1} parent=1 // pred_fallthru
      _
    // Predicated region
    $region14: #{tpu_custom_call.1} parent=1 // pred_check
      _
    $region15: #{tpu_custom_call.1} parent=1 // pred_check_branch
      %18 = sbr.rel (0) target = $region17
    $region16: #{tpu_custom_call.1} parent=1 // pred_region
      _
    $region17: #{tpu_custom_call.1} parent=1 // pred_fallthru
      _
    // Predicated region
    $region18: #{tpu_custom_call.1} parent=1 // pred_check
      _
    $region19: #{tpu_custom_call.1} parent=1 // pred_check_branch
      %20 = sbr.rel (0) target = $region21
    $region20: #{tpu_custom_call.1} parent=1 // pred_region
      _
    $region21: #{tpu_custom_call.1} parent=1 // pred_fallthru
      _
    %p22 = scmp.eq.s32.totalorder 0, 0
    // Predicated region
    $region22: #{tpu_custom_call.1} parent=1 // pred_check
      %p23 = pneg %p22
    $region23: #{tpu_custom_call.1} parent=1 // pred_check_branch
      %25 = sbr.rel (%p23) target = $region25
    $region24: #{tpu_custom_call.1} parent=1 // pred_region
      %v26 = vld [vmem:[%s4] sm:$0x1]
      %v28 = vlaneseq
      %v29 = vshrl.u32 %v28, 7
      %v30 = vsub.s32 0, %v29
      %v31 = vrot.slane %v26, %v30
      %vm33 = vcmask 523264
      %34 = vst.msk [vmem:[#allocation2] sm:$0xff] %vm33, %v31
      %35 = vst.msk [vmem:[#allocation2 + $0x8] sm:$0xff] %vm33, %v31
    $region25: #{tpu_custom_call.1} parent=1 // pred_fallthru
      _
    %v36 = vld [vmem:[#allocation2] sm:$0xff]
    %v37 = vld [vmem:[#allocation2 + $0x8] sm:$0xff]
    %v38 = vld [vmem:[%s0] sm:$0xff]
    %v39 = vld [vmem:[%s0 + $0x8] sm:$0xff]
    %v40 = vpack.c.bf16 %v39, %v38
    %v41 = vld [vmem:[%s1] sm:$0xff]
    %v42 = vld [vmem:[%s1 + $0x8] sm:$0xff]
    %v43 = vld [vmem:[%s1 + $0x10] sm:$0xff]
    %v44 = vld [vmem:[%s1 + $0x18] sm:$0xff]
    %v45 = vld [vmem:[%s1 + $0x20] sm:$0xff]
    %v46 = vld [vmem:[%s1 + $0x28] sm:$0xff]
    %v47 = vld [vmem:[%s1 + $0x30] sm:$0xff]
    %v48 = vld [vmem:[%s1 + $0x38] sm:$0xff]
    %v49 = vld [vmem:[%s1 + $0x40] sm:$0xff]
    %v50 = vld [vmem:[%s1 + $0x48] sm:$0xff]
    %v51 = vld [vmem:[%s1 + $0x50] sm:$0xff]
    %v52 = vld [vmem:[%s1 + $0x58] sm:$0xff]
    %v53 = vld [vmem:[%s1 + $0x60] sm:$0xff]
    %v54 = vld [vmem:[%s1 + $0x68] sm:$0xff]
    %v55 = vld [vmem:[%s1 + $0x70] sm:$0xff]
    %v56 = vld [vmem:[%s1 + $0x78] sm:$0xff]
    %v57 = vld [vmem:[%s2] sm:$0xf]
    %v59 = vlaneseq
    %v60 = vshrl.u32 %v59, 7
    %v61 = vsub.s32 0, %v60
    %v62 = vrot.slane %v57, %v61
    %v63 = vlaneseq
    %v64 = vshrl.u32 %v63, 7
    %v65 = vsub.s32 1, %v64
    %v66 = vrot.slane %v57, %v65
    %v67 = vlaneseq
    %v68 = vshrl.u32 %v67, 7
    %v69 = vsub.s32 2, %v68
    %v70 = vrot.slane %v57, %v69
    %v71 = vlaneseq
    %v72 = vshrl.u32 %v71, 7
    %v73 = vsub.s32 3, %v72
    %v74 = vrot.slane %v57, %v73
    %v95 = vunpack.c.l.b16 %v41
    %v96 = vunpack.c.h.b16 %v41
    %v97 = vunpack.c.l.b16 %v42
    %v98 = vunpack.c.h.b16 %v42
    %v99 = vunpack.c.l.b16 %v43
    %v100 = vunpack.c.h.b16 %v43
    %v101 = vunpack.c.l.b16 %v44
    %v102 = vunpack.c.h.b16 %v44
    %v103 = vunpack.c.l.b16 %v45
    %v104 = vunpack.c.h.b16 %v45
    %v105 = vunpack.c.l.b16 %v46
    %v106 = vunpack.c.h.b16 %v46
    %v107 = vunpack.c.l.b16 %v47
    %v108 = vunpack.c.h.b16 %v47
    %v109 = vunpack.c.l.b16 %v48
    %v110 = vunpack.c.h.b16 %v48
    %v111 = vunpack.c.l.b16 %v49
    %v112 = vunpack.c.h.b16 %v49
    %v113 = vunpack.c.l.b16 %v50
    %v114 = vunpack.c.h.b16 %v50
    %v115 = vunpack.c.l.b16 %v51
    %v116 = vunpack.c.h.b16 %v51
    %v117 = vunpack.c.l.b16 %v52
    %v118 = vunpack.c.h.b16 %v52
    %v119 = vunpack.c.l.b16 %v53
    %v120 = vunpack.c.h.b16 %v53
    %v121 = vunpack.c.l.b16 %v54
    %v122 = vunpack.c.h.b16 %v54
    %v123 = vunpack.c.l.b16 %v55
    %v124 = vunpack.c.h.b16 %v55
    %v125 = vunpack.c.l.b16 %v56
    %v126 = vunpack.c.h.b16 %v56
    %v127 = vpack.c.b16 %v99, %v95
    %v128 = vpack.c.b16 %v100, %v96
    %v129 = vpack.c.b16 %v101, %v97
    %v130 = vpack.c.b16 %v102, %v98
    %v131 = vpack.c.b16 %v107, %v103
    %v132 = vpack.c.b16 %v108, %v104
    %v133 = vpack.c.b16 %v109, %v105
    %v134 = vpack.c.b16 %v110, %v106
    %v135 = vpack.c.b16 %v115, %v111
    %v136 = vpack.c.b16 %v116, %v112
    %v137 = vpack.c.b16 %v117, %v113
    %v138 = vpack.c.b16 %v118, %v114
    %v139 = vpack.c.b16 %v123, %v119
    %v140 = vpack.c.b16 %v124, %v120
    %v141 = vpack.c.b16 %v125, %v121
    %v142 = vpack.c.b16 %v126, %v122
    %vm159 = vcmask 523264
    %v161 = vsel %vm159, %v40, 0
    %163 = vmatprep.subr.bf16.mxu0 0
    %164 = vmatpush1.bf16.msra.mxu0 0
    %165 = vmatprep.subr.bf16.mxu0 0
    %166 = vmatpush1.bf16.msra.mxu0 0
    %167 = vmatprep.subr.bf16.mxu0 0
    %168 = vmatpush1.bf16.msra.mxu0 0
    %169 = vmatprep.subr.bf16.mxu0 0
    %170 = vmatpush1.bf16.msra.mxu0 0
    %171 = vmatprep.subr.bf16.mxu0 %v140
    %172 = vmatpush1.bf16.msra.mxu0 %v139
    %173 = vmatprep.subr.bf16.mxu0 %v136
    %174 = vmatpush1.bf16.msra.mxu0 %v135
    %175 = vmatprep.subr.bf16.mxu0 %v132
    %176 = vmatpush1.bf16.msra.mxu0 %v131
    %177 = vmatprep.subr.bf16.mxu0 %v128
    %178 = vmatpush1.bf16.msra.mxu0 %v127
    %179 = vmatprep.subr.bf16.mxu0 0
    %180 = vmatpush2.bf16.msra.mxu0 0
    %181 = vmatprep.subr.bf16.mxu0 0
    %182 = vmatpush2.bf16.msra.mxu0 0
    %183 = vmatprep.subr.bf16.mxu0 0
    %184 = vmatpush2.bf16.msra.mxu0 0
    %185 = vmatprep.subr.bf16.mxu0 0
    %186 = vmatpush2.bf16.msra.mxu0 0
    %187 = vmatprep.subr.bf16.mxu0 0
    %188 = vmatpush2.bf16.msra.mxu0 0
    %189 = vmatprep.subr.bf16.mxu0 0
    %190 = vmatpush2.bf16.msra.mxu0 0
    %191 = vmatprep.subr.bf16.mxu0 0
    %192 = vmatpush2.bf16.msra.mxu0 0
    %193 = vmatprep.subr.bf16.mxu0 0
    %194 = vmatpush2.bf16.msra.mxu0 0
    %195 = vmatprep.mubr.bf16.mxu0 0
    %196 = vmatmul.mubr.bf16.gmra.mxu0 %v161
    %v197 = vpop.f32.mrf.mxu0
    %v198 = vadd.f32 %v62, %v197
    %v199 = vpop.f32.mrf.mxu0
    %v200 = vadd.f32 %v66, %v199
    %v201 = vpop.f32.mrf.mxu0
    %v202 = vadd.f32 %v62, %v201
    %v203 = vpop.f32.mrf.mxu0
    %v204 = vadd.f32 %v66, %v203
    %205 = vdwg.mxu0
    %206 = vmatprep.subr.bf16.mxu0 0
    %207 = vmatpush1.bf16.msra.mxu0 0
    %208 = vmatprep.subr.bf16.mxu0 0
    %209 = vmatpush1.bf16.msra.mxu0 0
    %210 = vmatprep.subr.bf16.mxu0 0
    %211 = vmatpush1.bf16.msra.mxu0 0
    %212 = vmatprep.subr.bf16.mxu0 0
    %213 = vmatpush1.bf16.msra.mxu0 0
    %214 = vmatprep.subr.bf16.mxu0 %v142
    %215 = vmatpush1.bf16.msra.mxu0 %v141
    %216 = vmatprep.subr.bf16.mxu0 %v138
    %217 = vmatpush1.bf16.msra.mxu0 %v137
    %218 = vmatprep.subr.bf16.mxu0 %v134
    %219 = vmatpush1.bf16.msra.mxu0 %v133
    %220 = vmatprep.subr.bf16.mxu0 %v130
    %221 = vmatpush1.bf16.msra.mxu0 %v129
    %222 = vmatprep.subr.bf16.mxu0 0
    %223 = vmatpush2.bf16.msra.mxu0 0
    %224 = vmatprep.subr.bf16.mxu0 0
    %225 = vmatpush2.bf16.msra.mxu0 0
    %226 = vmatprep.subr.bf16.mxu0 0
    %227 = vmatpush2.bf16.msra.mxu0 0
    %228 = vmatprep.subr.bf16.mxu0 0
    %229 = vmatpush2.bf16.msra.mxu0 0
    %230 = vmatprep.subr.bf16.mxu0 0
    %231 = vmatpush2.bf16.msra.mxu0 0
    %232 = vmatprep.subr.bf16.mxu0 0
    %233 = vmatpush2.bf16.msra.mxu0 0
    %234 = vmatprep.subr.bf16.mxu0 0
    %235 = vmatpush2.bf16.msra.mxu0 0
    %236 = vmatprep.subr.bf16.mxu0 0
    %237 = vmatpush2.bf16.msra.mxu0 0
    %238 = vmatprep.mubr.bf16.mxu0 0
    %239 = vmatmul.mubr.bf16.gmra.mxu0 %v161
    %v240 = vpop.f32.mrf.mxu0
    %v241 = vadd.f32 %v70, %v240
    %v242 = vpop.f32.mrf.mxu0
    %v243 = vadd.f32 %v74, %v242
    %v244 = vpop.f32.mrf.mxu0
    %v245 = vadd.f32 %v70, %v244
    %v246 = vpop.f32.mrf.mxu0
    %v247 = vadd.f32 %v74, %v246
    %248 = vdwg.mxu0
    %v249 = vxor.u32 %v198, 2147483648
    %v250 = vxor.u32 %v200, 2147483648
    %v251 = vxor.u32 %v202, 2147483648
    %v252 = vxor.u32 %v204, 2147483648
    %v253 = vmul.f32 %v249, 1.442695
    %v254 = vpow.pop %v253
    %v255 = vmul.f32 %v250, 1.442695
    %v256 = vpow.pop %v255
    %v257 = vmul.f32 %v251, 1.442695
    %v258 = vpow.pop %v257
    %v259 = vmul.f32 %v252, 1.442695
    %v260 = vpow.pop %v259
    %v261 = vadd.f32 %v254, 1.0
    %v262 = vadd.f32 %v256, 1.0
    %v263 = vadd.f32 %v258, 1.0
    %v264 = vadd.f32 %v260, 1.0
    %v265 = vrcp.pop %v261
    %v266 = vmul.f32 1.0, %v265
    %v267 = vrcp.pop %v262
    %v268 = vmul.f32 1.0, %v267
    %v269 = vrcp.pop %v263
    %v270 = vmul.f32 1.0, %v269
    %v271 = vrcp.pop %v264
    %v272 = vmul.f32 1.0, %v271
    %v273 = vmul.f32 %v198, %v266
    %v274 = vmul.f32 %v200, %v268
    %v275 = vmul.f32 %v202, %v270
    %v276 = vmul.f32 %v204, %v272
    %v277 = vmul.f32 %v273, %v241
    %v278 = vmul.f32 %v274, %v243
    %v279 = vmul.f32 %v275, %v245
    %v280 = vmul.f32 %v276, %v247
    %v281 = vpack.c.bf16 %v279, %v277
    %v282 = vpack.c.bf16 %v280, %v278
    %v283 = vld [vmem:[%s3] sm:$0xf]
    %v284 = vld [vmem:[%s3 + $0x4] sm:$0xf]
    %v285 = vld [vmem:[%s3 + $0x8] sm:$0xf]
    %v286 = vld [vmem:[%s3 + $0xc] sm:$0xf]
    %v287 = vld [vmem:[%s3 + $0x10] sm:$0xf]
    %v288 = vld [vmem:[%s3 + $0x14] sm:$0xf]
    %v289 = vld [vmem:[%s3 + $0x18] sm:$0xf]
    %v290 = vld [vmem:[%s3 + $0x1c] sm:$0xf]
    %v291 = vld [vmem:[%s3 + $0x20] sm:$0xf]
    %v292 = vld [vmem:[%s3 + $0x24] sm:$0xf]
    %v293 = vld [vmem:[%s3 + $0x28] sm:$0xf]
    %v294 = vld [vmem:[%s3 + $0x2c] sm:$0xf]
    %v295 = vld [vmem:[%s3 + $0x30] sm:$0xf]
    %v296 = vld [vmem:[%s3 + $0x34] sm:$0xf]
    %v297 = vld [vmem:[%s3 + $0x38] sm:$0xf]
    %v298 = vld [vmem:[%s3 + $0x3c] sm:$0xf]
    %v299 = vld [vmem:[%s3 + $0x40] sm:$0xf]
    %v300 = vld [vmem:[%s3 + $0x44] sm:$0xf]
    %v301 = vld [vmem:[%s3 + $0x48] sm:$0xf]
    %v302 = vld [vmem:[%s3 + $0x4c] sm:$0xf]
    %v303 = vld [vmem:[%s3 + $0x50] sm:$0xf]
    %v304 = vld [vmem:[%s3 + $0x54] sm:$0xf]
    %v305 = vld [vmem:[%s3 + $0x58] sm:$0xf]
    %v306 = vld [vmem:[%s3 + $0x5c] sm:$0xf]
    %v307 = vld [vmem:[%s3 + $0x60] sm:$0xf]
    %v308 = vld [vmem:[%s3 + $0x64] sm:$0xf]
    %v309 = vld [vmem:[%s3 + $0x68] sm:$0xf]
    %v310 = vld [vmem:[%s3 + $0x6c] sm:$0xf]
    %v311 = vld [vmem:[%s3 + $0x70] sm:$0xf]
    %v312 = vld [vmem:[%s3 + $0x74] sm:$0xf]
    %v313 = vld [vmem:[%s3 + $0x78] sm:$0xf]
    %v314 = vld [vmem:[%s3 + $0x7c] sm:$0xf]
    %v347 = vunpack.c.l.b16 %v283
    %v348 = vunpack.c.l.b16 %v284
    %v349 = vunpack.c.l.b16 %v285
    %v350 = vunpack.c.l.b16 %v286
    %v351 = vunpack.c.l.b16 %v287
    %v352 = vunpack.c.l.b16 %v288
    %v353 = vunpack.c.l.b16 %v289
    %v354 = vunpack.c.l.b16 %v290
    %v355 = vunpack.c.l.b16 %v291
    %v356 = vunpack.c.l.b16 %v292
    %v357 = vunpack.c.l.b16 %v293
    %v358 = vunpack.c.l.b16 %v294
    %v359 = vunpack.c.l.b16 %v295
    %v360 = vunpack.c.l.b16 %v296
    %v361 = vunpack.c.l.b16 %v297
    %v362 = vunpack.c.l.b16 %v298
    %v363 = vunpack.c.l.b16 %v299
    %v364 = vunpack.c.l.b16 %v300
    %v365 = vunpack.c.l.b16 %v301
    %v366 = vunpack.c.l.b16 %v302
    %v367 = vunpack.c.l.b16 %v303
    %v368 = vunpack.c.l.b16 %v304
    %v369 = vunpack.c.l.b16 %v305
    %v370 = vunpack.c.l.b16 %v306
    %v371 = vunpack.c.l.b16 %v307
    %v372 = vunpack.c.l.b16 %v308
    %v373 = vunpack.c.l.b16 %v309
    %v374 = vunpack.c.l.b16 %v310
    %v375 = vunpack.c.l.b16 %v311
    %v376 = vunpack.c.l.b16 %v312
    %v377 = vunpack.c.l.b16 %v313
    %v378 = vunpack.c.l.b16 %v314
    %v379 = vpack.c.b16 %v348, %v347
    %v380 = vpack.c.b16 %v350, %v349
    %v381 = vpack.c.b16 %v352, %v351
    %v382 = vpack.c.b16 %v354, %v353
    %v383 = vpack.c.b16 %v356, %v355
    %v384 = vpack.c.b16 %v358, %v357
    %v385 = vpack.c.b16 %v360, %v359
    %v386 = vpack.c.b16 %v362, %v361
    %v387 = vpack.c.b16 %v364, %v363
    %v388 = vpack.c.b16 %v366, %v365
    %v389 = vpack.c.b16 %v368, %v367
    %v390 = vpack.c.b16 %v370, %v369
    %v391 = vpack.c.b16 %v372, %v371
    %v392 = vpack.c.b16 %v374, %v373
    %v393 = vpack.c.b16 %v376, %v375
    %v394 = vpack.c.b16 %v378, %v377
    %411 = vmatprep.subr.bf16.mxu0 0
    %412 = vmatpush1.bf16.msra.mxu0 %v386
    %413 = vmatprep.subr.bf16.mxu0 0
    %414 = vmatpush1.bf16.msra.mxu0 %v385
    %415 = vmatprep.subr.bf16.mxu0 0
    %416 = vmatpush1.bf16.msra.mxu0 %v384
    %417 = vmatprep.subr.bf16.mxu0 0
    %418 = vmatpush1.bf16.msra.mxu0 %v383
    %419 = vmatprep.subr.bf16.mxu0 0
    %420 = vmatpush1.bf16.msra.mxu0 %v382
    %421 = vmatprep.subr.bf16.mxu0 0
    %422 = vmatpush1.bf16.msra.mxu0 %v381
    %423 = vmatprep.subr.bf16.mxu0 0
    %424 = vmatpush1.bf16.msra.mxu0 %v380
    %425 = vmatprep.subr.bf16.mxu0 0
    %426 = vmatpush1.bf16.msra.mxu0 %v379
    %427 = vmatprep.subr.bf16.mxu0 0
    %428 = vmatpush2.bf16.msra.mxu0 %v394
    %429 = vmatprep.subr.bf16.mxu0 0
    %430 = vmatpush2.bf16.msra.mxu0 %v393
    %431 = vmatprep.subr.bf16.mxu0 0
    %432 = vmatpush2.bf16.msra.mxu0 %v392
    %433 = vmatprep.subr.bf16.mxu0 0
    %434 = vmatpush2.bf16.msra.mxu0 %v391
    %435 = vmatprep.subr.bf16.mxu0 0
    %436 = vmatpush2.bf16.msra.mxu0 %v390
    %437 = vmatprep.subr.bf16.mxu0 0
    %438 = vmatpush2.bf16.msra.mxu0 %v389
    %439 = vmatprep.subr.bf16.mxu0 0
    %440 = vmatpush2.bf16.msra.mxu0 %v388
    %441 = vmatprep.subr.bf16.mxu0 0
    %442 = vmatpush2.bf16.msra.mxu0 %v387
    %443 = vmatprep.mubr.bf16.mxu0 %v282
    %444 = vmatmul.mubr.bf16.gmra.mxu0 %v281
    %v445 = vpop.f32.mrf.mxu0
    %v446 = vadd.f32 0.0, %v445
    %v447 = vpop.f32.mrf.mxu0
    %v448 = vpop.f32.mrf.mxu0
    %v449 = vadd.f32 0.0, %v448
    %v450 = vpop.f32.mrf.mxu0
    %451 = vdwg.mxu0
    %v452 = vadd.f32 %v36, %v446
    %v453 = vadd.f32 %v37, %v449
    %454 = vst.msk [vmem:[#allocation2] sm:$0xff] %vm159, %v452
    %455 = vst.msk [vmem:[#allocation2 + $0x8] sm:$0xff] %vm159, %v453
    // Predicated region
    $region26: #{tpu_custom_call.1} parent=1 // pred_check
      _
    $region27: #{tpu_custom_call.1} parent=1 // pred_check_branch
      %457 = sbr.rel (0) target = $region29
    $region28: #{tpu_custom_call.1} parent=1 // pred_region
      %s459 = ssub.s32 256, 256
      %460 = vsyncadd [#allocation3], %s459
      %s461 = sshll.u32 [#allocation2], 4
      %s462 = int_to_ptr.vmem [resolvable:$true] %s461
      %467 = dma.vmem_to_hbm [thread:$0]  %s462, 256, %s5, [#allocation3], 128, 128, 8
    $region29: #{tpu_custom_call.1} parent=1 // pred_fallthru
      _
    // Predicated region
    $region30: #{tpu_custom_call.1} parent=1 // pred_check
      _
    $region31: #{tpu_custom_call.1} parent=1 // pred_check_branch
      %469 = sbr.rel (0) target = $region33
    $region32: #{tpu_custom_call.1} parent=1 // pred_region
      %470 = dma.done [#allocation3], 256
    $region33: #{tpu_custom_call.1} parent=1 // pred_fallthru
      _
    %471 = vsyncpa [#allocation3], 1

</llo_original>
